<compile_context>
chip_gen: v5e
topology: v5e:2x2
jax: 0.10.0
libtpu: 0.0.40
codegen_flags: <defaults>
</compile_context>

<pallas_src>
import functools

import jax
import jax.numpy as jnp
from jax import lax
from jax.experimental import pallas as pl
from jax.experimental.pallas import tpu as pltpu


def _conv1d_2d_kernel(xm_ref, xh_ref, wt_ref, wf_ref, b_ref, o_ref,
                      *, tile_t, F, Cin, Cout, K, t_off, f_off):
    """One (batch, time-tile) block:  out = time_conv + freq_conv + bias.

    xm_ref: (1, tile_t, Fp, Cin)  bf16  padded rows [t0, t0 + tile_t)
    xh_ref: (1, K-1,    Fp, Cin)  bf16  padded rows [t0 + tile_t, t0 + tile_t + K - 1)
    wt_ref: (K, Cin, Cout)        bf16  time-conv taps
    wf_ref: (K, Cin, Cout)        bf16  freq-conv taps
    b_ref : (1, Cout)             f32   time_bias + freq_bias (folded)
    o_ref : (1, tile_t, F, Cout)  f32
    """
    # Overlapping (tile_t + K - 1)-row window for this tile (halo appended once).
    xw = jnp.concatenate([xm_ref[0], xh_ref[0]], axis=0)       # (tile_t+K-1, Fp, Cin)

    # Hoisted center crops: one freq-crop shared by all K time taps and one time-crop
    # shared by all K freq taps, instead of one full-tile relayout per tap.
    xc = xw[:, f_off:f_off + F, :]                             # (tile_t+K-1, F, Cin)
    xc2 = xc.reshape((tile_t + K - 1) * F, Cin)                # single reshape, reused
    xr = xw[t_off:t_off + tile_t, :, :]                        # (tile_t, Fp, Cin)

    # Folded bias initializes the f32 accumulator (no zeros-fill, no post-adds).
    acc = jnp.broadcast_to(b_ref[...], (tile_t * F, Cout)).astype(jnp.float32)

    # conv along time: tap j reads window rows [j, j + tile_t) -> cheap row slices of xc2.
    for j in range(K):
        acc = acc + jnp.dot(xc2[j * F:(j + tile_t) * F], wt_ref[j],
                            preferred_element_type=jnp.float32)

    # conv along freq: tap i reads freq columns [i, i + F) of the center time rows.
    for i in range(K):
        acc = acc + jnp.dot(xr[:, i:i + F, :].reshape(tile_t * F, Cin), wf_ref[i],
                            preferred_element_type=jnp.float32)

    o_ref[0] = acc.reshape(tile_t, F, Cout).astype(o_ref.dtype)


def _pick_time_tile(T, F, Fp, Cin, Cout, K, vmem_budget_bytes=16 * 1024 * 1024):
    """Largest time tile whose double-buffered working set fits the VMEM budget.

    Sized for the smallest-VMEM target (v7x: 64 MiB physical, 40 MiB requested below),
    leaving headroom for Mosaic internals and the auto-pipeline's second buffers.
    """
    bytes_per_row = (
        2 * 2 * Fp * Cin              # bf16 input block, double-buffered
        + 2 * 4 * F * Cout            # f32 output block, double-buffered
        + 2 * (2 * Fp + 3 * F) * Cin  # bf16 window / crop / per-tap temporaries
        + 2 * 4 * F * Cout            # f32 accumulator + store temporary
    )
    tile = max(1, vmem_budget_bytes // max(bytes_per_row, 1))
    tile = int(min(tile, 512, T))     # past ~512 rows pipeline efficiency flattens out
    if tile < T:
        tile = max(8, (tile // 8) * 8)  # keep streamed tiles sublane-aligned
    return tile


def conv1d_2d(x, time_w, time_b, freq_w, freq_b, *, kernel_size=3, causal=False,
              time_tile=None):
    """Pallas TPU forward of Conv1d_2d.

    x      : [B, T, F, Cin] f32 (channels-last SpeechBrain layout)
    time_w : [Cout, Cin, 1, K]   torch OIHW (H = freq, W = time)
    freq_w : [Cout, Cin, K, 1]
    """
    B, T, F, Cin = x.shape
    Cout = time_w.shape[0]
    K = kernel_size
    assert K % 2 == 1 and K >= 3, "kernel supports odd kernel_size >= 3 only"
    p = (K - 1) // 2
    f_off = p
    t_off = (K - 1) if causal else p

    # Time tiling: grid = (B, nT); each step consumes a (tile_t + K - 1)-row window.
    if time_tile is None:
        tile_t = _pick_time_tile(T, F, F + 2 * p, Cin, Cout, K)
    else:
        tile_t = int(max(1, min(time_tile, T)))
    nT = pl.cdiv(T, tile_t)
    Tmain = nT * tile_t

    # One padded bf16 input (bf16 halves HBM traffic of both the pad pass and the kernel).
    x16 = x.astype(jnp.bfloat16)
    if causal:
        # freq: 'same' reflect;  time: causal zero left-pad (K-1) + zero round-up.
        xpad = jnp.pad(x16, ((0, 0), (0, 0), (p, p), (0, 0)), mode="reflect")
        xpad = jnp.pad(xpad, ((0, 0), (K - 1, Tmain - T), (0, 0), (0, 0)))
    else:
        # single fused reflect pad over time and freq ('same' for both convs).
        xpad = jnp.pad(x16, ((0, 0), (p, p), (p, p), (0, 0)), mode="reflect")
        if Tmain > T:
            xpad = jnp.pad(xpad, ((0, 0), (0, Tmain - T), (0, 0), (0, 0)))
    Fp = F + 2 * p                        # xpad: [B, Tmain + K - 1, Fp, Cin]

    # Tiny per-tile halo side array (rows [(t+1)*tile_t, (t+1)*tile_t + K - 1) of xpad)
    # so overlapping time windows stream through plain auto-pipelined BlockSpecs.
    hidx = (jnp.arange(1, nT + 1)[:, None] * tile_t
            + jnp.arange(K - 1)[None, :]).reshape(-1)          # (nT*(K-1),)
    xhalo = xpad[:, hidx, :, :]                                # [B, nT*(K-1), Fp, Cin]

    # Repack torch OIHW weights as per-tap (K, Cin, Cout) bf16 matmul matrices and
    # fold the two biases into a single f32 vector.
    wt = jnp.transpose(time_w[:, :, 0, :], (2, 1, 0)).astype(jnp.bfloat16)
    wf = jnp.transpose(freq_w[:, :, :, 0], (2, 1, 0)).astype(jnp.bfloat16)
    bias = (time_b + freq_b).reshape(1, Cout).astype(jnp.float32)

    kernel = functools.partial(_conv1d_2d_kernel, tile_t=tile_t, F=F, Cin=Cin,
                               Cout=Cout, K=K, t_off=t_off, f_off=f_off)

    out = pl.pallas_call(
        kernel,
        out_shape=jax.ShapeDtypeStruct((B, Tmain, F, Cout), jnp.float32),
        grid_spec=pltpu.PrefetchScalarGridSpec(
            num_scalar_prefetch=0,
            grid=(B, nT),
            in_specs=[
                pl.BlockSpec((1, tile_t, Fp, Cin), lambda b, t: (b, t, 0, 0)),
                pl.BlockSpec((1, K - 1, Fp, Cin), lambda b, t: (b, t, 0, 0)),
                pl.BlockSpec((K, Cin, Cout), lambda b, t: (0, 0, 0)),
                pl.BlockSpec((K, Cin, Cout), lambda b, t: (0, 0, 0)),
                pl.BlockSpec((1, Cout), lambda b, t: (0, 0)),
            ],
            out_specs=pl.BlockSpec((1, tile_t, F, Cout), lambda b, t: (b, t, 0, 0)),
        ),
        compiler_params=pltpu.CompilerParams(
            dimension_semantics=("parallel", "parallel"),  # spreads (B, time-tiles) over v7x's 2 TCs
            vmem_limit_bytes=40 * 1024 * 1024,             # explicit; safe for v7x's 64 MiB VMEM
        ),
    )(xpad, xhalo, wt, wf, bias)

    return out[:, :T] if Tmain > T else out


def _ref_forward(x, time_w, time_b, freq_w, freq_b, *, kernel_size=3, causal=False):
    """Pure-JAX reference (lax.conv) replicating the PyTorch/SpeechBrain forward."""
    K = kernel_size
    p = (K - 1) // 2
    # freq_conv: 'same' (reflect) over freq only.
    xf = jnp.pad(x, ((0, 0), (0, 0), (p, p), (0, 0)), mode="reflect")
    wf_hwio = jnp.transpose(freq_w, (3, 2, 1, 0))        # (1, K, Cin, Cout)
    freq_out = lax.conv_general_dilated(
        xf, wf_hwio, window_strides=(1, 1), padding="VALID",
        dimension_numbers=("NHWC", "HWIO", "NHWC")) + freq_b
    # time_conv: causal zero pad + valid, or 'same' (reflect) over time only.
    if causal:
        xt = jnp.pad(x, ((0, 0), (K - 1, 0), (0, 0), (0, 0)))
    else:
        xt = jnp.pad(x, ((0, 0), (p, p), (0, 0), (0, 0)), mode="reflect")
    wt_hwio = jnp.transpose(time_w, (3, 2, 1, 0))        # (K, 1, Cin, Cout)
    time_out = lax.conv_general_dilated(
        xt, wt_hwio, window_strides=(1, 1), padding="VALID",
        dimension_numbers=("NHWC", "HWIO", "NHWC")) + time_b
    return time_out + freq_out


if __name__ == "__main__":
    B, T, F, Cin, Cout, K = 2, 16, 16, 4, 8, 3

    key = jax.random.PRNGKey(0)
    k1, k2, k3, k4, k5 = jax.random.split(key, 5)
    x = jax.random.normal(k1, (B, T, F, Cin), jnp.float32)
    scale = 1.0 / jnp.sqrt(Cin * K)
    time_w = jax.random.normal(k2, (Cout, Cin, 1, K), jnp.float32) * scale
    time_b = jax.random.normal(k3, (Cout,), jnp.float32) * 0.1
    freq_w = jax.random.normal(k4, (Cout, Cin, K, 1), jnp.float32) * scale
    freq_b = jax.random.normal(k5, (Cout,), jnp.float32) * 0.1

    # bf16-rounded copies for a tight reference comparison (kernel uses bf16 inputs,
    # f32 accumulation), so tolerance stays small.
    xq = x.astype(jnp.bfloat16).astype(jnp.float32)
    twq = time_w.astype(jnp.bfloat16).astype(jnp.float32)
    fwq = freq_w.astype(jnp.bfloat16).astype(jnp.float32)

    # Non-causal, with a small explicit time tile so the tiling + halo path is exercised.
    out = conv1d_2d(x, time_w, time_b, freq_w, freq_b, kernel_size=K,
                    causal=False, time_tile=8)
    out = jax.block_until_ready(out)
    assert out.shape == (B, T, F, Cout), out.shape
    ref = _ref_forward(xq, twq, time_b, fwq, freq_b, kernel_size=K, causal=False)
    err = float(jnp.max(jnp.abs(out - ref)))
    assert err < 2e-3, f"non-causal mismatch vs reference: {err}"

    # Causal path, auto tile size (single tile).
    out_c = conv1d_2d(x, time_w, time_b, freq_w, freq_b, kernel_size=K, causal=True)
    out_c = jax.block_until_ready(out_c)
    ref_c = _ref_forward(xq, twq, time_b, fwq, freq_b, kernel_size=K, causal=True)
    err_c = float(jnp.max(jnp.abs(out_c - ref_c)))
    assert err_c < 2e-3, f"causal mismatch vs reference: {err_c}"

    print("KERNEL_OK")
</pallas_src>

<mosaic_0001>
module attributes {stable_mosaic.version = 11 : i64} {
  func.func @_conv1d_2d_kernel(%arg0: i32, %arg1: i32, %arg2: memref<1x8x18x4xbf16, #tpu.memory_space<vmem>>, %arg3: memref<1x2x18x4xbf16, #tpu.memory_space<vmem>>, %arg4: memref<3x4x8xbf16, #tpu.memory_space<vmem>>, %arg5: memref<3x4x8xbf16, #tpu.memory_space<vmem>>, %arg6: memref<1x8xf32, #tpu.memory_space<vmem>>, %arg7: memref<1x8x16x8xf32, #tpu.memory_space<vmem>>) attributes {dimension_semantics = [#tpu.dimension_semantics<parallel>, #tpu.dimension_semantics<parallel>], iteration_bounds = array<i64: 2, 2>, scalar_prefetch = 0 : i64, scratch_operands = 0 : i64, tpu.core_type = #tpu.core_type<tc>, window_params = [{transform_indices = @transform_0, window_bounds = array<i64: 1, 8, 18, 4>}, {transform_indices = @transform_1, window_bounds = array<i64: 1, 2, 18, 4>}, {pipeline_mode = #tpu.pipeline_mode<synchronous>, transform_indices = @transform_2, window_bounds = array<i64: 3, 4, 8>}, {pipeline_mode = #tpu.pipeline_mode<synchronous>, transform_indices = @transform_3, window_bounds = array<i64: 3, 4, 8>}, {pipeline_mode = #tpu.pipeline_mode<synchronous>, transform_indices = @transform_4, window_bounds = array<i64: 1, 8>}, {transform_indices = @transform_5, window_bounds = array<i64: 1, 8, 16, 8>}]} {
    %c0 = arith.constant 0 : index
    %c0_0 = arith.constant 0 : index
    %c0_1 = arith.constant 0 : index
    %c0_2 = arith.constant 0 : index
    %0 = vector.load %arg2[%c0, %c0_0, %c0_1, %c0_2] : memref<1x8x18x4xbf16, #tpu.memory_space<vmem>>, vector<1x8x18x4xbf16>
    %1 = vector.shape_cast %0 : vector<1x8x18x4xbf16> to vector<8x18x4xbf16>
    %c0_3 = arith.constant 0 : index
    %c0_4 = arith.constant 0 : index
    %c0_5 = arith.constant 0 : index
    %c0_6 = arith.constant 0 : index
    %2 = vector.load %arg3[%c0_3, %c0_4, %c0_5, %c0_6] : memref<1x2x18x4xbf16, #tpu.memory_space<vmem>>, vector<1x2x18x4xbf16>
    %3 = vector.shape_cast %2 : vector<1x2x18x4xbf16> to vector<2x18x4xbf16>
    %4 = tpu.concatenate %1, %3 in 0 : vector<8x18x4xbf16>, vector<2x18x4xbf16> -> vector<10x18x4xbf16>
    %5 = vector.extract_strided_slice %4 {offsets = [0, 1, 0], sizes = [10, 16, 4], strides = [1, 1, 1]} : vector<10x18x4xbf16> to vector<10x16x4xbf16>
    %6 = vector.shape_cast %5 : vector<10x16x4xbf16> to vector<160x4xbf16>
    %7 = vector.extract_strided_slice %4 {offsets = [1, 0, 0], sizes = [8, 18, 4], strides = [1, 1, 1]} : vector<10x18x4xbf16> to vector<8x18x4xbf16>
    %c0_7 = arith.constant 0 : index
    %c0_8 = arith.constant 0 : index
    %8 = vector.load %arg6[%c0_7, %c0_8] : memref<1x8xf32, #tpu.memory_space<vmem>>, vector<1x8xf32>
    %9 = vector.shape_cast %8 : vector<1x8xf32> to vector<1x8xf32>
    %10 = vector.broadcast %9 : vector<1x8xf32> to vector<128x8xf32>
    %11 = vector.extract_strided_slice %6 {offsets = [0, 0], sizes = [128, 4], strides = [1, 1]} : vector<160x4xbf16> to vector<128x4xbf16>
    %c0_9 = arith.constant 0 : index
    %c0_10 = arith.constant 0 : index
    %c0_11 = arith.constant 0 : index
    %12 = vector.load %arg4[%c0_9, %c0_10, %c0_11] : memref<3x4x8xbf16, #tpu.memory_space<vmem>>, vector<1x4x8xbf16>
    %13 = vector.shape_cast %12 : vector<1x4x8xbf16> to vector<4x8xbf16>
    %cst = arith.constant dense<0.000000e+00> : vector<128x8xf32>
    %14 = tpu.matmul %11, %13, %cst {dimension_numbers = #tpu.dot_dimension_numbers<[1], [0], [0], [1], [0, 0, 1, 1], [], []>} : vector<128x4xbf16>, vector<4x8xbf16>, vector<128x8xf32> -> vector<128x8xf32>
    %15 = arith.addf %10, %14 : vector<128x8xf32>
    %16 = vector.extract_strided_slice %6 {offsets = [16, 0], sizes = [128, 4], strides = [1, 1]} : vector<160x4xbf16> to vector<128x4xbf16>
    %c1 = arith.constant 1 : index
    %c0_12 = arith.constant 0 : index
    %c0_13 = arith.constant 0 : index
    %17 = vector.load %arg4[%c1, %c0_12, %c0_13] : memref<3x4x8xbf16, #tpu.memory_space<vmem>>, vector<1x4x8xbf16>
    %18 = vector.shape_cast %17 : vector<1x4x8xbf16> to vector<4x8xbf16>
    %cst_14 = arith.constant dense<0.000000e+00> : vector<128x8xf32>
    %19 = tpu.matmul %16, %18, %cst_14 {dimension_numbers = #tpu.dot_dimension_numbers<[1], [0], [0], [1], [0, 0, 1, 1], [], []>} : vector<128x4xbf16>, vector<4x8xbf16>, vector<128x8xf32> -> vector<128x8xf32>
    %20 = arith.addf %15, %19 : vector<128x8xf32>
    %21 = vector.extract_strided_slice %6 {offsets = [32, 0], sizes = [128, 4], strides = [1, 1]} : vector<160x4xbf16> to vector<128x4xbf16>
    %c2 = arith.constant 2 : index
    %c0_15 = arith.constant 0 : index
    %c0_16 = arith.constant 0 : index
    %22 = vector.load %arg4[%c2, %c0_15, %c0_16] : memref<3x4x8xbf16, #tpu.memory_space<vmem>>, vector<1x4x8xbf16>
    %23 = vector.shape_cast %22 : vector<1x4x8xbf16> to vector<4x8xbf16>
    %cst_17 = arith.constant dense<0.000000e+00> : vector<128x8xf32>
    %24 = tpu.matmul %21, %23, %cst_17 {dimension_numbers = #tpu.dot_dimension_numbers<[1], [0], [0], [1], [0, 0, 1, 1], [], []>} : vector<128x4xbf16>, vector<4x8xbf16>, vector<128x8xf32> -> vector<128x8xf32>
    %25 = arith.addf %20, %24 : vector<128x8xf32>
    %26 = vector.extract_strided_slice %7 {offsets = [0, 0, 0], sizes = [8, 16, 4], strides = [1, 1, 1]} : vector<8x18x4xbf16> to vector<8x16x4xbf16>
    %27 = vector.shape_cast %26 : vector<8x16x4xbf16> to vector<128x4xbf16>
    %c0_18 = arith.constant 0 : index
    %c0_19 = arith.constant 0 : index
    %c0_20 = arith.constant 0 : index
    %28 = vector.load %arg5[%c0_18, %c0_19, %c0_20] : memref<3x4x8xbf16, #tpu.memory_space<vmem>>, vector<1x4x8xbf16>
    %29 = vector.shape_cast %28 : vector<1x4x8xbf16> to vector<4x8xbf16>
    %cst_21 = arith.constant dense<0.000000e+00> : vector<128x8xf32>
    %30 = tpu.matmul %27, %29, %cst_21 {dimension_numbers = #tpu.dot_dimension_numbers<[1], [0], [0], [1], [0, 0, 1, 1], [], []>} : vector<128x4xbf16>, vector<4x8xbf16>, vector<128x8xf32> -> vector<128x8xf32>
    %31 = arith.addf %25, %30 : vector<128x8xf32>
    %32 = vector.extract_strided_slice %7 {offsets = [0, 1, 0], sizes = [8, 16, 4], strides = [1, 1, 1]} : vector<8x18x4xbf16> to vector<8x16x4xbf16>
    %33 = vector.shape_cast %32 : vector<8x16x4xbf16> to vector<128x4xbf16>
    %c1_22 = arith.constant 1 : index
    %c0_23 = arith.constant 0 : index
    %c0_24 = arith.constant 0 : index
    %34 = vector.load %arg5[%c1_22, %c0_23, %c0_24] : memref<3x4x8xbf16, #tpu.memory_space<vmem>>, vector<1x4x8xbf16>
    %35 = vector.shape_cast %34 : vector<1x4x8xbf16> to vector<4x8xbf16>
    %cst_25 = arith.constant dense<0.000000e+00> : vector<128x8xf32>
    %36 = tpu.matmul %33, %35, %cst_25 {dimension_numbers = #tpu.dot_dimension_numbers<[1], [0], [0], [1], [0, 0, 1, 1], [], []>} : vector<128x4xbf16>, vector<4x8xbf16>, vector<128x8xf32> -> vector<128x8xf32>
    %37 = arith.addf %31, %36 : vector<128x8xf32>
    %38 = vector.extract_strided_slice %7 {offsets = [0, 2, 0], sizes = [8, 16, 4], strides = [1, 1, 1]} : vector<8x18x4xbf16> to vector<8x16x4xbf16>
    %39 = vector.shape_cast %38 : vector<8x16x4xbf16> to vector<128x4xbf16>
    %c2_26 = arith.constant 2 : index
    %c0_27 = arith.constant 0 : index
    %c0_28 = arith.constant 0 : index
    %40 = vector.load %arg5[%c2_26, %c0_27, %c0_28] : memref<3x4x8xbf16, #tpu.memory_space<vmem>>, vector<1x4x8xbf16>
    %41 = vector.shape_cast %40 : vector<1x4x8xbf16> to vector<4x8xbf16>
    %cst_29 = arith.constant dense<0.000000e+00> : vector<128x8xf32>
    %42 = tpu.matmul %39, %41, %cst_29 {dimension_numbers = #tpu.dot_dimension_numbers<[1], [0], [0], [1], [0, 0, 1, 1], [], []>} : vector<128x4xbf16>, vector<4x8xbf16>, vector<128x8xf32> -> vector<128x8xf32>
    %43 = arith.addf %37, %42 : vector<128x8xf32>
    %44 = vector.shape_cast %43 : vector<128x8xf32> to vector<8x16x8xf32>
    %c0_30 = arith.constant 0 : index
    %c0_31 = arith.constant 0 : index
    %c0_32 = arith.constant 0 : index
    %c0_33 = arith.constant 0 : index
    %45 = vector.load %arg7[%c0_30, %c0_31, %c0_32, %c0_33] : memref<1x8x16x8xf32, #tpu.memory_space<vmem>>, vector<1x8x16x8xf32>
    %46 = vector.shape_cast %45 : vector<1x8x16x8xf32> to vector<8x16x8xf32>
    %47 = vector.shape_cast %44 : vector<8x16x8xf32> to vector<1x8x16x8xf32>
    tpu.vector_store %arg7[%c0_30, %c0_31, %c0_32, %c0_33], %47 {strides = array<i32>} : memref<1x8x16x8xf32, #tpu.memory_space<vmem>>, vector<1x8x16x8xf32>,
    return
  }
  func.func @transform_0(%arg0: i32, %arg1: i32) -> (i32, i32, i32, i32) {
    %c0_i32 = arith.constant 0 : i32
    %c0_i32_0 = arith.constant 0 : i32
    %c0_i32_1 = arith.constant 0 : i32
    return %arg0, %arg1, %c0_i32, %c0_i32_0 : i32, i32, i32, i32
  }
  func.func @transform_1(%arg0: i32, %arg1: i32) -> (i32, i32, i32, i32) {
    %c0_i32 = arith.constant 0 : i32
    %c0_i32_0 = arith.constant 0 : i32
    %c0_i32_1 = arith.constant 0 : i32
    return %arg0, %arg1, %c0_i32, %c0_i32_0 : i32, i32, i32, i32
  }
  func.func @transform_2(%arg0: i32, %arg1: i32) -> (i32, i32, i32) {
    %c0_i32 = arith.constant 0 : i32
    %c0_i32_0 = arith.constant 0 : i32
    %c0_i32_1 = arith.constant 0 : i32
    %c0_i32_2 = arith.constant 0 : i32
    return %c0_i32, %c0_i32_0, %c0_i32_1 : i32, i32, i32
  }
  func.func @transform_3(%arg0: i32, %arg1: i32) -> (i32, i32, i32) {
    %c0_i32 = arith.constant 0 : i32
    %c0_i32_0 = arith.constant 0 : i32
    %c0_i32_1 = arith.constant 0 : i32
    %c0_i32_2 = arith.constant 0 : i32
    return %c0_i32, %c0_i32_0, %c0_i32_1 : i32, i32, i32
  }
  func.func @transform_4(%arg0: i32, %arg1: i32) -> (i32, i32) {
    %c0_i32 = arith.constant 0 : i32
    %c0_i32_0 = arith.constant 0 : i32
    %c0_i32_1 = arith.constant 0 : i32
    return %c0_i32, %c0_i32_0 : i32, i32
  }
  func.func @transform_5(%arg0: i32, %arg1: i32) -> (i32, i32, i32, i32) {
    %c0_i32 = arith.constant 0 : i32
    %c0_i32_0 = arith.constant 0 : i32
    %c0_i32_1 = arith.constant 0 : i32
    return %arg0, %arg1, %c0_i32, %c0_i32_0 : i32, i32, i32, i32
  }
}

</mosaic_0001>

<llo_original>
// kernel: tpu_custom_call.1
$region0: #{tpu_custom_call.1}
  #allocation0 [shape = 'u32[]', space=smem, size = 0x4, offset = 0x4, fixed_abs, tag = 'smem constant byte address 0x4 - core index']
  #allocation1 [shape = 'u32[72,128]{1,0:T(1,128)}', space=vmem, size = 0x9000, scoped, tag = 'internal scratch']
  %s0 = inlined_call_operand.vmem [shape: bf16[2,18,18,4], index: 0, kind: input, shape index: {}]
  %s1 = inlined_call_operand.vmem [shape: bf16[2,4,18,4], index: 1, kind: input, shape index: {}]
  %s2 = inlined_call_operand.vmem [shape: bf16[3,4,8], index: 2, kind: input, shape index: {}]
  %s3 = inlined_call_operand.vmem [shape: bf16[3,4,8], index: 3, kind: input, shape index: {}]
  %s4 = inlined_call_operand.vmem [shape: f32[1,8], index: 4, kind: input, shape index: {}]
  %s5 = inlined_call_operand.vmem [shape: f32[2,16,16,8], index: 5, kind: output, shape index: {}]
  %s6 = sld [smem:[#allocation0]]
  $region53: #{tpu_custom_call.1} parent=0
    _
  %s8 = ssub.s32 1, %s6
  %s9 = scalar_select 0, %s8, %s6
  loop: start=0, step=1, limit=6
  $region2: #{tpu_custom_call.1} parent=0 // loop_pre_header
    _
  $region3: #{tpu_custom_call.1} parent=0 // loop_header
    %s11 = sphi 0, %s15
    %p12 = scmp.ge.s32.totalorder %s11, 6
    %s18 = sphi 0, %s30
    %s19 = sphi 0, %s26
    %s20 = sphi 0, %s18
    %s21 = sphi 0, %s19
    %s22 = sphi 0, %s20
    %s23 = sphi 0, %s21
    %s35 = sphi 0, %s37
    %s38 = sphi 0, %s35
    %s39 = sphi 0, %s38
    %s55 = sphi 0, %s39
    %s63 = sphi 0, %s65
    %s66 = sphi 0, %s63
    %s67 = sphi 0, %s66
    %s83 = sphi 0, %s67
    %s87 = sphi 0, %s87
    %s89 = sphi 0, %s87
    %s90 = sphi 0, %s89
    %s104 = sphi 0, %s90
    %s108 = sphi 0, %s108
    %s110 = sphi 0, %s108
    %s111 = sphi 0, %s110
    %s125 = sphi 0, %s111
    %s129 = sphi 0, %s129
    %s131 = sphi 0, %s129
    %s132 = sphi 0, %s131
    %s146 = sphi 0, %s132
    %s154 = sphi 0, %s156
    %s157 = sphi 0, %s154
    %s158 = sphi 0, %s157
    %s174 = sphi 0, %s158
  $region4: #{tpu_custom_call.1} parent=0 // loop_header_branch
    %14 = sbr.rel (%p12) target = $region8
  $region5: #{tpu_custom_call.1} parent=0 // loop_body
    %s16 = ssub.s32 %s11, 1
    %s17 = ssub.s32 %s11, 2
    %s24 = sadd.s32 1, %s19
    %p25 = scmp.ge.s32.totalorder %s24, 2
    %s26 = scalar_select %p25, 0, %s24
    %s27 = sadd.s32 1, %s18
    %s28 = scalar_select %p25, %s27, %s18
    %p29 = scmp.ge.s32.totalorder %s28, 2
    %s30 = scalar_select %p29, 0, %s28
    %s31 = ssub.s32 %s18, %s30
    %s32 = ssub.s32 %s19, %s26
    %s33 = sor.u32 %s31, %s32
    %p34 = scmp.eq.s32.totalorder %s33, 0
    %s36 = sadd.s32 %s35, 1
    %s37 = scalar_select %p34, %s35, %s36
    %p40 = pneg %p34
    %p41 = scmp.eq.s32.totalorder %s11, 3
    %p42 = por %p40, %p41
    %p43 = scmp.ne.s32.totalorder %s35, %s38
    %p44 = scmp.eq.s32.totalorder %s11, 0
    %p45 = por %p43, %p44
    %p46 = scmp.ne.s32.totalorder %s35, %s38
    %p47 = scmp.eq.s32.totalorder %s16, 3
    %p48 = por %p46, %p47
    %p49 = scmp.ne.s32.totalorder %s38, %s39
    %p50 = scmp.eq.s32.totalorder %s16, 0
    %p51 = por %p49, %p50
    %p52 = scmp.ne.s32.totalorder %s38, %s39
    %p53 = scmp.eq.s32.totalorder %s17, 3
    %p54 = por %p52, %p53
    %p56 = scmp.ne.s32.totalorder %s39, %s55
    %p57 = scmp.eq.s32.totalorder %s17, 0
    %p58 = por %p56, %p57
    %s59 = ssub.s32 %s18, %s30
    %s60 = ssub.s32 %s19, %s26
    %s61 = sor.u32 %s59, %s60
    %p62 = scmp.eq.s32.totalorder %s61, 0
    %s64 = sadd.s32 %s63, 1
    %s65 = scalar_select %p62, %s63, %s64
    %p68 = pneg %p62
    %p69 = scmp.eq.s32.totalorder %s11, 3
    %p70 = por %p68, %p69
    %p71 = scmp.ne.s32.totalorder %s63, %s66
    %p72 = scmp.eq.s32.totalorder %s11, 0
    %p73 = por %p71, %p72
    %p74 = scmp.ne.s32.totalorder %s63, %s66
    %p75 = scmp.eq.s32.totalorder %s16, 3
    %p76 = por %p74, %p75
    %p77 = scmp.ne.s32.totalorder %s66, %s67
    %p78 = scmp.eq.s32.totalorder %s16, 0
    %p79 = por %p77, %p78
    %p80 = scmp.ne.s32.totalorder %s66, %s67
    %p81 = scmp.eq.s32.totalorder %s17, 3
    %p82 = por %p80, %p81
    %p84 = scmp.ne.s32.totalorder %s67, %s83
    %p85 = scmp.eq.s32.totalorder %s17, 0
    %p86 = por %p84, %p85
    %s88 = sadd.s32 %s87, 1
    %p91 = scmp.eq.s32.totalorder %s11, 3
    %p92 = scmp.ne.s32.totalorder %s87, %s89
    %p93 = scmp.eq.s32.totalorder %s11, 0
    %p94 = por %p92, %p93
    %p95 = scmp.ne.s32.totalorder %s87, %s89
    %p96 = scmp.eq.s32.totalorder %s16, 3
    %p97 = por %p95, %p96
    %p98 = scmp.ne.s32.totalorder %s89, %s90
    %p99 = scmp.eq.s32.totalorder %s16, 0
    %p100 = por %p98, %p99
    %p101 = scmp.ne.s32.totalorder %s89, %s90
    %p102 = scmp.eq.s32.totalorder %s17, 3
    %p103 = por %p101, %p102
    %p105 = scmp.ne.s32.totalorder %s90, %s104
    %p106 = scmp.eq.s32.totalorder %s17, 0
    %p107 = por %p105, %p106
    %s109 = sadd.s32 %s108, 1
    %p112 = scmp.eq.s32.totalorder %s11, 3
    %p113 = scmp.ne.s32.totalorder %s108, %s110
    %p114 = scmp.eq.s32.totalorder %s11, 0
    %p115 = por %p113, %p114
    %p116 = scmp.ne.s32.totalorder %s108, %s110
    %p117 = scmp.eq.s32.totalorder %s16, 3
    %p118 = por %p116, %p117
    %p119 = scmp.ne.s32.totalorder %s110, %s111
    %p120 = scmp.eq.s32.totalorder %s16, 0
    %p121 = por %p119, %p120
    %p122 = scmp.ne.s32.totalorder %s110, %s111
    %p123 = scmp.eq.s32.totalorder %s17, 3
    %p124 = por %p122, %p123
    %p126 = scmp.ne.s32.totalorder %s111, %s125
    %p127 = scmp.eq.s32.totalorder %s17, 0
    %p128 = por %p126, %p127
    %s130 = sadd.s32 %s129, 1
    %p133 = scmp.eq.s32.totalorder %s11, 3
    %p134 = scmp.ne.s32.totalorder %s129, %s131
    %p135 = scmp.eq.s32.totalorder %s11, 0
    %p136 = por %p134, %p135
    %p137 = scmp.ne.s32.totalorder %s129, %s131
    %p138 = scmp.eq.s32.totalorder %s16, 3
    %p139 = por %p137, %p138
    %p140 = scmp.ne.s32.totalorder %s131, %s132
    %p141 = scmp.eq.s32.totalorder %s16, 0
    %p142 = por %p140, %p141
    %p143 = scmp.ne.s32.totalorder %s131, %s132
    %p144 = scmp.eq.s32.totalorder %s17, 3
    %p145 = por %p143, %p144
    %p147 = scmp.ne.s32.totalorder %s132, %s146
    %p148 = scmp.eq.s32.totalorder %s17, 0
    %p149 = por %p147, %p148
    %s150 = ssub.s32 %s18, %s30
    %s151 = ssub.s32 %s19, %s26
    %s152 = sor.u32 %s150, %s151
    %p153 = scmp.eq.s32.totalorder %s152, 0
    %s155 = sadd.s32 %s154, 1
    %s156 = scalar_select %p153, %s154, %s155
    %p159 = pneg %p153
    %p160 = scmp.eq.s32.totalorder %s11, 3
    %p161 = por %p159, %p160
    %p162 = scmp.ne.s32.totalorder %s154, %s157
    %p163 = scmp.eq.s32.totalorder %s11, 0
    %p164 = por %p162, %p163
    %p165 = scmp.ne.s32.totalorder %s154, %s157
    %p166 = scmp.eq.s32.totalorder %s16, 3
    %p167 = por %p165, %p166
    %p168 = scmp.ne.s32.totalorder %s157, %s158
    %p169 = scmp.eq.s32.totalorder %s16, 0
    %p170 = por %p168, %p169
    %p171 = scmp.ne.s32.totalorder %s157, %s158
    %p172 = scmp.eq.s32.totalorder %s17, 3
    %p173 = por %p171, %p172
    %p175 = scmp.ne.s32.totalorder %s158, %s174
    %p176 = scmp.eq.s32.totalorder %s17, 0
    %p177 = por %p175, %p176
    %p178 = scmp.le.s32.totalorder 1, %s11
    %p179 = scmp.lt.s32.totalorder %s11, 5
    %p180 = pnand %p178, %p179
    %p181 = pneg %p180
    // Predicated region
    $region9: #{tpu_custom_call.1} parent=5 // pred_check
      _
    $region10: #{tpu_custom_call.1} parent=5 // pred_check_branch
      %183 = sbr.rel (%p180) target = $region12
    $region11: #{tpu_custom_call.1} parent=5 // pred_region
      %s184 = ssub.s32 %s11, 1
      // Predicated region
      $region13: #{tpu_custom_call.1} parent=11 // pred_check
        %p185 = pneg %p100
      $region14: #{tpu_custom_call.1} parent=11 // pred_check_branch
        %187 = sbr.rel (%p185) target = $region16
      $region15: #{tpu_custom_call.1} parent=11 // pred_region
        _
      $region16: #{tpu_custom_call.1} parent=11 // pred_fallthru
        _
      // Predicated region
      $region17: #{tpu_custom_call.1} parent=11 // pred_check
        %p188 = pneg %p121
      $region18: #{tpu_custom_call.1} parent=11 // pred_check_branch
        %190 = sbr.rel (%p188) target = $region20
      $region19: #{tpu_custom_call.1} parent=11 // pred_region
        _
      $region20: #{tpu_custom_call.1} parent=11 // pred_fallthru
        _
      // Predicated region
      $region21: #{tpu_custom_call.1} parent=11 // pred_check
        %p191 = pneg %p142
      $region22: #{tpu_custom_call.1} parent=11 // pred_check_branch
        %193 = sbr.rel (%p191) target = $region24
      $region23: #{tpu_custom_call.1} parent=11 // pred_region
        _
      $region24: #{tpu_custom_call.1} parent=11 // pred_fallthru
        _
    $region12: #{tpu_custom_call.1} parent=5 // pred_fallthru
      _
    %p194 = scmp.lt.s32.totalorder %s11, 4
    // Predicated region
    $region25: #{tpu_custom_call.1} parent=5 // pred_check
      %p195 = pneg %p194
    $region26: #{tpu_custom_call.1} parent=5 // pred_check_branch
      %197 = sbr.rel (%p195) target = $region28
    $region27: #{tpu_custom_call.1} parent=5 // pred_region
      // Predicated region
      $region29: #{tpu_custom_call.1} parent=27 // pred_check
        %p198 = pneg %p45
      $region30: #{tpu_custom_call.1} parent=27 // pred_check_branch
        %200 = sbr.rel (%p198) target = $region32
      $region31: #{tpu_custom_call.1} parent=27 // pred_region
        %s201 = smul.u32 8, %s19
        %s202 = ssub.s32 18, %s201
        %p203 = scmp.lt.s32.totalorder %s202, 8
        %s204 = scalar_select %p203, %s202, 8
        %s205 = smul.u32 4, %s204
        %s206 = smul.u32 %s205, 3
        %p207 = scmp.lt.s32.totalorder %s18, 1
        %s208 = scalar_select %p207, %s18, 1
        %p209 = scmp.lt.s32.totalorder %s201, 17
        %s210 = scalar_select %p209, %s201, 17
        %s211 = smul.addr %s210, 3
        %s212 = smul.addr %s208, 54
        %s213 = sadd.s32 %s211, %s212
        %s214 = smul.addr %s213, 4
        %s215 = scalar_lea.vmem %s0, %s214
        %s216 = smul.u32 8, %s19
        %s217 = ssub.s32 18, %s216
        %p218 = scmp.lt.s32.totalorder %s217, 8
        %s219 = scalar_select %p218, %s217, 8
        %s220 = smul.u32 4, %s219
        %s221 = smul.u32 %s220, 3
      $region32: #{tpu_custom_call.1} parent=27 // pred_fallthru
        _
      // Predicated region
      $region33: #{tpu_custom_call.1} parent=27 // pred_check
        %p222 = pneg %p73
      $region34: #{tpu_custom_call.1} parent=27 // pred_check_branch
        %224 = sbr.rel (%p222) target = $region36
      $region35: #{tpu_custom_call.1} parent=27 // pred_region
        %s225 = smul.u32 2, %s19
        %p226 = scmp.lt.s32.totalorder %s18, 1
        %s227 = scalar_select %p226, %s18, 1
        %p228 = scmp.lt.s32.totalorder %s225, 3
        %s229 = scalar_select %p228, %s225, 3
        %s230 = smul.addr %s229, 3
        %s231 = smul.addr %s227, 12
        %s232 = sadd.s32 %s230, %s231
        %s233 = smul.addr %s232, 4
        %s234 = scalar_lea.vmem %s1, %s233
        %s235 = smul.u32 2, %s19
      $region36: #{tpu_custom_call.1} parent=27 // pred_fallthru
        _
    $region28: #{tpu_custom_call.1} parent=5 // pred_fallthru
      _
    %p236 = scmp.le.s32.totalorder 1, %s11
    %p237 = scmp.lt.s32.totalorder %s11, 5
    %p238 = pnand %p236, %p237
    %p239 = pneg %p238
    // Predicated region
    $region37: #{tpu_custom_call.1} parent=5 // pred_check
      _
    $region38: #{tpu_custom_call.1} parent=5 // pred_check_branch
      %241 = sbr.rel (%p238) target = $region40
    $region39: #{tpu_custom_call.1} parent=5 // pred_region
      %s242 = ssub.s32 %s11, 1
      %s243 = smul.u32 8, %s21
      %s244 = ssub.s32 18, %s243
      %p245 = scmp.lt.s32.totalorder %s244, 8
      %s246 = scalar_select %p245, %s244, 8
      %s247 = smul.u32 4, %s246
      %s248 = smul.u32 %s247, 3
      %p249 = scmp.lt.s32.totalorder %s20, 1
      %s250 = scalar_select %p249, %s20, 1
      %p251 = scmp.lt.s32.totalorder %s243, 17
      %s252 = scalar_select %p251, %s243, 17
      %s253 = smul.addr %s252, 3
      %s254 = smul.addr %s250, 54
      %s255 = sadd.s32 %s253, %s254
      %s256 = smul.addr %s255, 4
      %s257 = scalar_lea.vmem %s0, %s256
      %p258 = pneg %p51
      %p259 = pneg %p48
      %s260 = smul.u32 2, %s21
      %p261 = scmp.lt.s32.totalorder %s20, 1
      %s262 = scalar_select %p261, %s20, 1
      %p263 = scmp.lt.s32.totalorder %s260, 3
      %s264 = scalar_select %p263, %s260, 3
      %s265 = smul.addr %s264, 3
      %s266 = smul.addr %s262, 12
      %s267 = sadd.s32 %s265, %s266
      %s268 = smul.addr %s267, 4
      %s269 = scalar_lea.vmem %s1, %s268
      %p270 = pneg %p79
      %p271 = pneg %p76
      %p272 = pneg %p100
      %p273 = pneg %p97
      %p274 = pneg %p121
      %p275 = pneg %p118
      %p276 = pneg %p142
      %p277 = pneg %p139
      %p278 = pneg %p170
      %p279 = pneg %p167
      %s280 = smul.u32 8, %s21
      %p281 = scmp.lt.s32.totalorder %s20, 1
      %s282 = scalar_select %p281, %s20, 1
      %p283 = scmp.lt.s32.totalorder %s280, 15
      %s284 = scalar_select %p283, %s280, 15
      %s285 = smul.addr %s284, 2
      %s286 = smul.addr %s282, 32
      %s287 = sadd.s32 %s285, %s286
      %s288 = smul.addr %s287, 8
      %s289 = scalar_lea.vmem %s5, %s288
      %s290 = smul.u32 8, %s21
      %s291 = ssub.s32 18, %s290
      %p292 = scmp.lt.s32.totalorder %s291, 8
      %s293 = scalar_select %p292, %s291, 8
      %s294 = smul.u32 4, %s293
      %s295 = smul.u32 %s294, 3
      %p296 = scmp.lt.s32.totalorder %s20, 1
      %s297 = scalar_select %p296, %s20, 1
      %p298 = scmp.lt.s32.totalorder %s290, 17
      %s299 = scalar_select %p298, %s290, 17
      %s300 = smul.addr %s299, 3
      %s301 = smul.addr %s297, 54
      %s302 = sadd.s32 %s300, %s301
      %s303 = smul.addr %s302, 4
      %s304 = scalar_lea.vmem %s0, %s303
      %s305 = smul.u32 8, %s21
      %s306 = ssub.s32 18, %s305
      %p307 = scmp.lt.s32.totalorder %s306, 8
      %s308 = scalar_select %p307, %s306, 8
      %s309 = smul.u32 4, %s308
      %s310 = smul.u32 %s309, 3
      %s311 = smul.u32 2, %s21
      %p312 = scmp.lt.s32.totalorder %s20, 1
      %s313 = scalar_select %p312, %s20, 1
      %p314 = scmp.lt.s32.totalorder %s311, 3
      %s315 = scalar_select %p314, %s311, 3
      %s316 = smul.addr %s315, 3
      %s317 = smul.addr %s313, 12
      %s318 = sadd.s32 %s316, %s317
      %s319 = smul.addr %s318, 4
      %s320 = scalar_lea.vmem %s1, %s319
      %s321 = smul.u32 2, %s21
      %s322 = smul.u32 8, %s21
      %p323 = scmp.lt.s32.totalorder %s20, 1
      %s324 = scalar_select %p323, %s20, 1
      %p325 = scmp.lt.s32.totalorder %s322, 15
      %s326 = scalar_select %p325, %s322, 15
      %s327 = smul.addr %s326, 2
      %s328 = smul.addr %s324, 32
      %s329 = sadd.s32 %s327, %s328
      %s330 = smul.addr %s329, 8
      %s331 = scalar_lea.vmem %s5, %s330
      %s332 = smul.u32 8, %s21
      %v334 = vld [vmem:[%s304] sm:$0xf]
      %v335 = vld [vmem:[%s304 + $0x4] sm:$0xf]
      %v336 = vld [vmem:[%s304 + $0x8] sm:$0x1]
      %v337 = vld [vmem:[%s304 + $0xc] sm:$0xf]
      %v338 = vld [vmem:[%s304 + $0x10] sm:$0xf]
      %v339 = vld [vmem:[%s304 + $0x14] sm:$0x1]
      %v340 = vld [vmem:[%s304 + $0x18] sm:$0xf]
      %v341 = vld [vmem:[%s304 + $0x1c] sm:$0xf]
      %v342 = vld [vmem:[%s304 + $0x20] sm:$0x1]
      %v343 = vld [vmem:[%s304 + $0x24] sm:$0xf]
      %v344 = vld [vmem:[%s304 + $0x28] sm:$0xf]
      %v345 = vld [vmem:[%s304 + $0x2c] sm:$0x1]
      %v346 = vld [vmem:[%s304 + $0x30] sm:$0xf]
      %v347 = vld [vmem:[%s304 + $0x34] sm:$0xf]
      %v348 = vld [vmem:[%s304 + $0x38] sm:$0x1]
      %v349 = vld [vmem:[%s304 + $0x3c] sm:$0xf]
      %v350 = vld [vmem:[%s304 + $0x40] sm:$0xf]
      %v351 = vld [vmem:[%s304 + $0x44] sm:$0x1]
      %v352 = vld [vmem:[%s304 + $0x48] sm:$0xf]
      %v353 = vld [vmem:[%s304 + $0x4c] sm:$0xf]
      %v354 = vld [vmem:[%s304 + $0x50] sm:$0x1]
      %v355 = vld [vmem:[%s304 + $0x54] sm:$0xf]
      %v356 = vld [vmem:[%s304 + $0x58] sm:$0xf]
      %v357 = vld [vmem:[%s304 + $0x5c] sm:$0x1]
      %v358 = vld [vmem:[%s320] sm:$0xf]
      %v359 = vld [vmem:[%s320 + $0x4] sm:$0xf]
      %v360 = vld [vmem:[%s320 + $0x8] sm:$0x1]
      %v361 = vld [vmem:[%s320 + $0xc] sm:$0xf]
      %v362 = vld [vmem:[%s320 + $0x10] sm:$0xf]
      %v363 = vld [vmem:[%s320 + $0x14] sm:$0x1]
      %vm364 = vsmask.f32 3328
      %vm365 = vsmask.f32 7440
      %vm366 = vmor %vm364, %vm365
      %v368 = vshrl.u32 %v334, 16
      %v370 = vrot.slane %v368, 4
      %v371 = vshll.u32 %v334, 16
      %v373 = vrot.slane %v371, 5
      %v374 = vor.u32 %v370, %v373
      %v375 = vrot.slane %v374, 4
      %v377 = vshll.u32 %v335, 16
      %v379 = vrot.slane %v377, 5
      %v380 = vsel %vm366, %v375, %v379
      %v381 = vshrl.u32 %v335, 16
      %v383 = vrot.slane %v381, 4
      %v384 = vor.u32 %v383, %v379
      %v385 = vrot.slane %v384, 4
      %v387 = vshll.u32 %v336, 16
      %v389 = vrot.slane %v387, 5
      %v390 = vsel %vm366, %v385, %v389
      %v392 = vshrl.u32 %v337, 16
      %v394 = vrot.slane %v392, 4
      %v395 = vshll.u32 %v337, 16
      %v397 = vrot.slane %v395, 5
      %v398 = vor.u32 %v394, %v397
      %v399 = vrot.slane %v398, 4
      %v401 = vshll.u32 %v338, 16
      %v403 = vrot.slane %v401, 5
      %v404 = vsel %vm366, %v399, %v403
      %v405 = vshrl.u32 %v338, 16
      %v407 = vrot.slane %v405, 4
      %v408 = vor.u32 %v407, %v403
      %v409 = vrot.slane %v408, 4
      %v411 = vshll.u32 %v339, 16
      %v413 = vrot.slane %v411, 5
      %v414 = vsel %vm366, %v409, %v413
      %v416 = vshrl.u32 %v340, 16
      %v418 = vrot.slane %v416, 4
      %v419 = vshll.u32 %v340, 16
      %v421 = vrot.slane %v419, 5
      %v422 = vor.u32 %v418, %v421
      %v423 = vrot.slane %v422, 4
      %v425 = vshll.u32 %v341, 16
      %v427 = vrot.slane %v425, 5
      %v428 = vsel %vm366, %v423, %v427
      %v429 = vshrl.u32 %v341, 16
      %v431 = vrot.slane %v429, 4
      %v432 = vor.u32 %v431, %v427
      %v433 = vrot.slane %v432, 4
      %v435 = vshll.u32 %v342, 16
      %v437 = vrot.slane %v435, 5
      %v438 = vsel %vm366, %v433, %v437
      %v440 = vshrl.u32 %v343, 16
      %v442 = vrot.slane %v440, 4
      %v443 = vshll.u32 %v343, 16
      %v445 = vrot.slane %v443, 5
      %v446 = vor.u32 %v442, %v445
      %v447 = vrot.slane %v446, 4
      %v449 = vshll.u32 %v344, 16
      %v451 = vrot.slane %v449, 5
      %v452 = vsel %vm366, %v447, %v451
      %v453 = vshrl.u32 %v344, 16
      %v455 = vrot.slane %v453, 4
      %v456 = vor.u32 %v455, %v451
      %v457 = vrot.slane %v456, 4
      %v459 = vshll.u32 %v345, 16
      %v461 = vrot.slane %v459, 5
      %v462 = vsel %vm366, %v457, %v461
      %v464 = vshrl.u32 %v346, 16
      %v466 = vrot.slane %v464, 4
      %v467 = vshll.u32 %v346, 16
      %v469 = vrot.slane %v467, 5
      %v470 = vor.u32 %v466, %v469
      %v471 = vrot.slane %v470, 4
      %v473 = vshll.u32 %v347, 16
      %v475 = vrot.slane %v473, 5
      %v476 = vsel %vm366, %v471, %v475
      %v477 = vshrl.u32 %v347, 16
      %v479 = vrot.slane %v477, 4
      %v480 = vor.u32 %v479, %v475
      %v481 = vrot.slane %v480, 4
      %v483 = vshll.u32 %v348, 16
      %v485 = vrot.slane %v483, 5
      %v486 = vsel %vm366, %v481, %v485
      %v488 = vshrl.u32 %v349, 16
      %v490 = vrot.slane %v488, 4
      %v491 = vshll.u32 %v349, 16
      %v493 = vrot.slane %v491, 5
      %v494 = vor.u32 %v490, %v493
      %v495 = vrot.slane %v494, 4
      %v497 = vshll.u32 %v350, 16
      %v499 = vrot.slane %v497, 5
      %v500 = vsel %vm366, %v495, %v499
      %v501 = vshrl.u32 %v350, 16
      %v503 = vrot.slane %v501, 4
      %v504 = vor.u32 %v503, %v499
      %v505 = vrot.slane %v504, 4
      %v507 = vshll.u32 %v351, 16
      %v509 = vrot.slane %v507, 5
      %v510 = vsel %vm366, %v505, %v509
      %v512 = vshrl.u32 %v352, 16
      %v514 = vrot.slane %v512, 4
      %v515 = vshll.u32 %v352, 16
      %v517 = vrot.slane %v515, 5
      %v518 = vor.u32 %v514, %v517
      %v519 = vrot.slane %v518, 4
      %v521 = vshll.u32 %v353, 16
      %v523 = vrot.slane %v521, 5
      %v524 = vsel %vm366, %v519, %v523
      %v525 = vshrl.u32 %v353, 16
      %v527 = vrot.slane %v525, 4
      %v528 = vor.u32 %v527, %v523
      %v529 = vrot.slane %v528, 4
      %v531 = vshll.u32 %v354, 16
      %v533 = vrot.slane %v531, 5
      %v534 = vsel %vm366, %v529, %v533
      %v536 = vshrl.u32 %v355, 16
      %v538 = vrot.slane %v536, 4
      %v539 = vshll.u32 %v355, 16
      %v541 = vrot.slane %v539, 5
      %v542 = vor.u32 %v538, %v541
      %v543 = vrot.slane %v542, 4
      %v545 = vshll.u32 %v356, 16
      %v547 = vrot.slane %v545, 5
      %v548 = vsel %vm366, %v543, %v547
      %v549 = vshrl.u32 %v356, 16
      %v551 = vrot.slane %v549, 4
      %v552 = vor.u32 %v551, %v547
      %v553 = vrot.slane %v552, 4
      %v555 = vshll.u32 %v357, 16
      %v557 = vrot.slane %v555, 5
      %v558 = vsel %vm366, %v553, %v557
      %v560 = vshrl.u32 %v358, 16
      %v562 = vrot.slane %v560, 4
      %v563 = vshll.u32 %v358, 16
      %v565 = vrot.slane %v563, 5
      %v566 = vor.u32 %v562, %v565
      %v567 = vrot.slane %v566, 4
      %v569 = vshll.u32 %v359, 16
      %v571 = vrot.slane %v569, 5
      %v572 = vsel %vm366, %v567, %v571
      %v573 = vshrl.u32 %v359, 16
      %v575 = vrot.slane %v573, 4
      %v576 = vor.u32 %v575, %v571
      %v577 = vrot.slane %v576, 4
      %v579 = vshll.u32 %v360, 16
      %v581 = vrot.slane %v579, 5
      %v582 = vsel %vm366, %v577, %v581
      %v584 = vshrl.u32 %v361, 16
      %v586 = vrot.slane %v584, 4
      %v587 = vshll.u32 %v361, 16
      %v589 = vrot.slane %v587, 5
      %v590 = vor.u32 %v586, %v589
      %v591 = vrot.slane %v590, 4
      %v593 = vshll.u32 %v362, 16
      %v595 = vrot.slane %v593, 5
      %v596 = vsel %vm366, %v591, %v595
      %v597 = vshrl.u32 %v362, 16
      %v599 = vrot.slane %v597, 4
      %v600 = vor.u32 %v599, %v595
      %v601 = vrot.slane %v600, 4
      %v603 = vshll.u32 %v363, 16
      %v605 = vrot.slane %v603, 5
      %v606 = vsel %vm366, %v601, %v605
      %v607 = vld [vmem:[%s4] sm:$0x1]
      %v609 = vperm.slane %v607, 0
      %v611 = vld [vmem:[%s2] sm:$0x3]
      %v612 = vunpack.c.l.b16 %v380
      %v613 = vunpack.c.l.b16 %v390
      %v614 = vunpack.c.l.b16 %v404
      %v615 = vunpack.c.l.b16 %v414
      %v616 = vunpack.c.l.b16 %v428
      %v617 = vunpack.c.l.b16 %v438
      %v618 = vunpack.c.l.b16 %v452
      %v619 = vunpack.c.l.b16 %v462
      %v620 = vunpack.c.l.b16 %v476
      %v621 = vunpack.c.l.b16 %v486
      %v622 = vunpack.c.l.b16 %v500
      %v623 = vunpack.c.l.b16 %v510
      %v624 = vunpack.c.l.b16 %v524
      %v625 = vunpack.c.l.b16 %v534
      %v626 = vunpack.c.l.b16 %v548
      %v627 = vunpack.c.l.b16 %v558
      %v628 = vpack.c.b16 %v613, %v612
      %v629 = vpack.c.b16 %v615, %v614
      %v630 = vpack.c.b16 %v617, %v616
      %v631 = vpack.c.b16 %v619, %v618
      %v632 = vpack.c.b16 %v621, %v620
      %v633 = vpack.c.b16 %v623, %v622
      %v634 = vpack.c.b16 %v625, %v624
      %v635 = vpack.c.b16 %v627, %v626
      %vm636 = vcmask 31744
      %v638 = vsel %vm636, %v628, 0
      %v641 = vsel %vm636, %v629, 0
      %v644 = vsel %vm636, %v630, 0
      %v647 = vsel %vm636, %v631, 0
      %v650 = vsel %vm636, %v632, 0
      %v653 = vsel %vm636, %v633, 0
      %v656 = vsel %vm636, %v634, 0
      %v659 = vsel %vm636, %v635, 0
      %vm661 = vcmask 1041408
      %v663 = vsel %vm661, %v611, 0
      %665 = vmatpush.bf16.msra.mxu0 0
      %666 = vmatpush.bf16.msra.mxu0 0
      %667 = vmatpush.bf16.msra.mxu0 0
      %668 = vmatpush.bf16.msra.mxu0 0
      %669 = vmatpush.bf16.msra.mxu0 0
      %670 = vmatpush.bf16.msra.mxu0 0
      %671 = vmatpush.bf16.msra.mxu0 0
      %672 = vmatpush.bf16.msra.mxu0 %v663
      %673 = vmatmul.bf16.gmra.mxu0 %v638
      %v674 = vpop.f32.mrf.mxu0
      %v675 = vadd.f32 0.0, %v674
      %v676 = vpop.f32.mrf.mxu0
      %v677 = vadd.f32 0.0, %v676
      %678 = vmatmul.bf16.gmra.mxu0 %v641
      %v679 = vpop.f32.mrf.mxu0
      %v680 = vadd.f32 0.0, %v679
      %v681 = vpop.f32.mrf.mxu0
      %v682 = vadd.f32 0.0, %v681
      %683 = vmatmul.bf16.gmra.mxu0 %v644
      %v684 = vpop.f32.mrf.mxu0
      %v685 = vadd.f32 0.0, %v684
      %v686 = vpop.f32.mrf.mxu0
      %v687 = vadd.f32 0.0, %v686
      %688 = vmatmul.bf16.gmra.mxu0 %v647
      %v689 = vpop.f32.mrf.mxu0
      %v690 = vadd.f32 0.0, %v689
      %v691 = vpop.f32.mrf.mxu0
      %v692 = vadd.f32 0.0, %v691
      %693 = vmatmul.bf16.gmra.mxu0 %v650
      %v694 = vpop.f32.mrf.mxu0
      %v695 = vadd.f32 0.0, %v694
      %v696 = vpop.f32.mrf.mxu0
      %v697 = vadd.f32 0.0, %v696
      %698 = vmatmul.bf16.gmra.mxu0 %v653
      %v699 = vpop.f32.mrf.mxu0
      %v700 = vadd.f32 0.0, %v699
      %v701 = vpop.f32.mrf.mxu0
      %v702 = vadd.f32 0.0, %v701
      %703 = vmatmul.bf16.gmra.mxu0 %v656
      %v704 = vpop.f32.mrf.mxu0
      %v705 = vadd.f32 0.0, %v704
      %v706 = vpop.f32.mrf.mxu0
      %v707 = vadd.f32 0.0, %v706
      %708 = vmatmul.bf16.gmra.mxu0 %v659
      %v709 = vpop.f32.mrf.mxu0
      %v710 = vadd.f32 0.0, %v709
      %v711 = vpop.f32.mrf.mxu0
      %v712 = vadd.f32 0.0, %v711
      %713 = vdwg.mxu0
      %v714 = vadd.f32 %v609, %v675
      %v715 = vadd.f32 %v609, %v677
      %v716 = vadd.f32 %v609, %v680
      %v717 = vadd.f32 %v609, %v682
      %v718 = vadd.f32 %v609, %v685
      %v719 = vadd.f32 %v609, %v687
      %v720 = vadd.f32 %v609, %v690
      %v721 = vadd.f32 %v609, %v692
      %v722 = vadd.f32 %v609, %v695
      %v723 = vadd.f32 %v609, %v697
      %v724 = vadd.f32 %v609, %v700
      %v725 = vadd.f32 %v609, %v702
      %v726 = vadd.f32 %v609, %v705
      %v727 = vadd.f32 %v609, %v707
      %v728 = vadd.f32 %v609, %v710
      %v729 = vadd.f32 %v609, %v712
      %s730 = scalar_lea.vmem %s2, 2
      %v731 = vld [vmem:[%s730] sm:$0x3]
      %v732 = vunpack.c.l.b16 %v572
      %v733 = vunpack.c.l.b16 %v582
      %v734 = vpack.c.b16 %v733, %v732
      %v736 = vsel %vm636, %v734, 0
      %v739 = vsel %vm661, %v731, 0
      %741 = vmatpush.bf16.msra.mxu0 0
      %742 = vmatpush.bf16.msra.mxu0 0
      %743 = vmatpush.bf16.msra.mxu0 0
      %744 = vmatpush.bf16.msra.mxu0 0
      %745 = vmatpush.bf16.msra.mxu0 0
      %746 = vmatpush.bf16.msra.mxu0 0
      %747 = vmatpush.bf16.msra.mxu0 0
      %748 = vmatpush.bf16.msra.mxu0 %v739
      %749 = vmatmul.bf16.gmra.mxu0 %v641
      %v750 = vpop.f32.mrf.mxu0
      %v751 = vadd.f32 0.0, %v750
      %v752 = vpop.f32.mrf.mxu0
      %v753 = vadd.f32 0.0, %v752
      %754 = vmatmul.bf16.gmra.mxu0 %v644
      %v755 = vpop.f32.mrf.mxu0
      %v756 = vadd.f32 0.0, %v755
      %v757 = vpop.f32.mrf.mxu0
      %v758 = vadd.f32 0.0, %v757
      %759 = vmatmul.bf16.gmra.mxu0 %v647
      %v760 = vpop.f32.mrf.mxu0
      %v761 = vadd.f32 0.0, %v760
      %v762 = vpop.f32.mrf.mxu0
      %v763 = vadd.f32 0.0, %v762
      %764 = vmatmul.bf16.gmra.mxu0 %v650
      %v765 = vpop.f32.mrf.mxu0
      %v766 = vadd.f32 0.0, %v765
      %v767 = vpop.f32.mrf.mxu0
      %v768 = vadd.f32 0.0, %v767
      %769 = vmatmul.bf16.gmra.mxu0 %v653
      %v770 = vpop.f32.mrf.mxu0
      %v771 = vadd.f32 0.0, %v770
      %v772 = vpop.f32.mrf.mxu0
      %v773 = vadd.f32 0.0, %v772
      %774 = vmatmul.bf16.gmra.mxu0 %v656
      %v775 = vpop.f32.mrf.mxu0
      %v776 = vadd.f32 0.0, %v775
      %v777 = vpop.f32.mrf.mxu0
      %v778 = vadd.f32 0.0, %v777
      %779 = vmatmul.bf16.gmra.mxu0 %v659
      %v780 = vpop.f32.mrf.mxu0
      %v781 = vadd.f32 0.0, %v780
      %v782 = vpop.f32.mrf.mxu0
      %v783 = vadd.f32 0.0, %v782
      %784 = vmatmul.bf16.gmra.mxu0 %v736
      %v785 = vpop.f32.mrf.mxu0
      %v786 = vadd.f32 0.0, %v785
      %v787 = vpop.f32.mrf.mxu0
      %v788 = vadd.f32 0.0, %v787
      %789 = vdwg.mxu0
      %v790 = vadd.f32 %v714, %v751
      %v791 = vadd.f32 %v715, %v753
      %v792 = vadd.f32 %v716, %v756
      %v793 = vadd.f32 %v717, %v758
      %v794 = vadd.f32 %v718, %v761
      %v795 = vadd.f32 %v719, %v763
      %v796 = vadd.f32 %v720, %v766
      %v797 = vadd.f32 %v721, %v768
      %v798 = vadd.f32 %v722, %v771
      %v799 = vadd.f32 %v723, %v773
      %v800 = vadd.f32 %v724, %v776
      %v801 = vadd.f32 %v725, %v778
      %v802 = vadd.f32 %v726, %v781
      %v803 = vadd.f32 %v727, %v783
      %v804 = vadd.f32 %v728, %v786
      %v805 = vadd.f32 %v729, %v788
      %s806 = scalar_lea.vmem %s2, 4
      %v807 = vld [vmem:[%s806] sm:$0x3]
      %v808 = vunpack.c.l.b16 %v596
      %v809 = vunpack.c.l.b16 %v606
      %v810 = vpack.c.b16 %v809, %v808
      %v812 = vsel %vm636, %v810, 0
      %v815 = vsel %vm661, %v807, 0
      %817 = vmatpush.bf16.msra.mxu0 0
      %818 = vmatpush.bf16.msra.mxu0 0
      %819 = vmatpush.bf16.msra.mxu0 0
      %820 = vmatpush.bf16.msra.mxu0 0
      %821 = vmatpush.bf16.msra.mxu0 0
      %822 = vmatpush.bf16.msra.mxu0 0
      %823 = vmatpush.bf16.msra.mxu0 0
      %824 = vmatpush.bf16.msra.mxu0 %v815
      %825 = vmatmul.bf16.gmra.mxu0 %v644
      %v826 = vpop.f32.mrf.mxu0
      %v827 = vadd.f32 0.0, %v826
      %v828 = vpop.f32.mrf.mxu0
      %v829 = vadd.f32 0.0, %v828
      %830 = vmatmul.bf16.gmra.mxu0 %v647
      %v831 = vpop.f32.mrf.mxu0
      %v832 = vadd.f32 0.0, %v831
      %v833 = vpop.f32.mrf.mxu0
      %v834 = vadd.f32 0.0, %v833
      %835 = vmatmul.bf16.gmra.mxu0 %v650
      %v836 = vpop.f32.mrf.mxu0
      %v837 = vadd.f32 0.0, %v836
      %v838 = vpop.f32.mrf.mxu0
      %v839 = vadd.f32 0.0, %v838
      %840 = vmatmul.bf16.gmra.mxu0 %v653
      %v841 = vpop.f32.mrf.mxu0
      %v842 = vadd.f32 0.0, %v841
      %v843 = vpop.f32.mrf.mxu0
      %v844 = vadd.f32 0.0, %v843
      %845 = vmatmul.bf16.gmra.mxu0 %v656
      %v846 = vpop.f32.mrf.mxu0
      %v847 = vadd.f32 0.0, %v846
      %v848 = vpop.f32.mrf.mxu0
      %v849 = vadd.f32 0.0, %v848
      %850 = vmatmul.bf16.gmra.mxu0 %v659
      %v851 = vpop.f32.mrf.mxu0
      %v852 = vadd.f32 0.0, %v851
      %v853 = vpop.f32.mrf.mxu0
      %v854 = vadd.f32 0.0, %v853
      %855 = vmatmul.bf16.gmra.mxu0 %v736
      %v856 = vpop.f32.mrf.mxu0
      %v857 = vadd.f32 0.0, %v856
      %v858 = vpop.f32.mrf.mxu0
      %v859 = vadd.f32 0.0, %v858
      %860 = vmatmul.bf16.gmra.mxu0 %v812
      %v861 = vpop.f32.mrf.mxu0
      %v862 = vadd.f32 0.0, %v861
      %v863 = vpop.f32.mrf.mxu0
      %v864 = vadd.f32 0.0, %v863
      %865 = vdwg.mxu0
      %v866 = vadd.f32 %v790, %v827
      %v867 = vadd.f32 %v791, %v829
      %v868 = vadd.f32 %v792, %v832
      %v869 = vadd.f32 %v793, %v834
      %v870 = vadd.f32 %v794, %v837
      %v871 = vadd.f32 %v795, %v839
      %v872 = vadd.f32 %v796, %v842
      %v873 = vadd.f32 %v797, %v844
      %v874 = vadd.f32 %v798, %v847
      %v875 = vadd.f32 %v799, %v849
      %v876 = vadd.f32 %v800, %v852
      %v877 = vadd.f32 %v801, %v854
      %v878 = vadd.f32 %v802, %v857
      %v879 = vadd.f32 %v803, %v859
      %v880 = vadd.f32 %v804, %v862
      %v881 = vadd.f32 %v805, %v864
      %v882 = vld [vmem:[%s3] sm:$0x3]
      %v899 = vunpack.c.l.b16 %v337
      %v900 = vunpack.c.l.b16 %v338
      %v901 = vunpack.c.l.b16 %v340
      %v902 = vunpack.c.l.b16 %v341
      %v903 = vunpack.c.l.b16 %v343
      %v904 = vunpack.c.l.b16 %v344
      %v905 = vunpack.c.l.b16 %v346
      %v906 = vunpack.c.l.b16 %v347
      %v907 = vunpack.c.l.b16 %v349
      %v908 = vunpack.c.l.b16 %v350
      %v909 = vunpack.c.l.b16 %v352
      %v910 = vunpack.c.l.b16 %v353
      %v911 = vunpack.c.l.b16 %v355
      %v912 = vunpack.c.l.b16 %v356
      %v913 = vunpack.c.l.b16 %v358
      %v914 = vunpack.c.l.b16 %v359
      %v915 = vpack.c.b16 %v900, %v899
      %v916 = vpack.c.b16 %v902, %v901
      %v917 = vpack.c.b16 %v904, %v903
      %v918 = vpack.c.b16 %v906, %v905
      %v919 = vpack.c.b16 %v908, %v907
      %v920 = vpack.c.b16 %v910, %v909
      %v921 = vpack.c.b16 %v912, %v911
      %v922 = vpack.c.b16 %v914, %v913
      %v924 = vsel %vm636, %v915, 0
      %v927 = vsel %vm636, %v916, 0
      %v930 = vsel %vm636, %v917, 0
      %v933 = vsel %vm636, %v918, 0
      %v936 = vsel %vm636, %v919, 0
      %v939 = vsel %vm636, %v920, 0
      %v942 = vsel %vm636, %v921, 0
      %v945 = vsel %vm636, %v922, 0
      %v948 = vsel %vm661, %v882, 0
      %950 = vmatpush.bf16.msra.mxu0 0
      %951 = vmatpush.bf16.msra.mxu0 0
      %952 = vmatpush.bf16.msra.mxu0 0
      %953 = vmatpush.bf16.msra.mxu0 0
      %954 = vmatpush.bf16.msra.mxu0 0
      %955 = vmatpush.bf16.msra.mxu0 0
      %956 = vmatpush.bf16.msra.mxu0 0
      %957 = vmatpush.bf16.msra.mxu0 %v948
      %958 = vmatmul.bf16.gmra.mxu0 %v924
      %v959 = vpop.f32.mrf.mxu0
      %v960 = vadd.f32 0.0, %v959
      %v961 = vpop.f32.mrf.mxu0
      %v962 = vadd.f32 0.0, %v961
      %963 = vmatmul.bf16.gmra.mxu0 %v927
      %v964 = vpop.f32.mrf.mxu0
      %v965 = vadd.f32 0.0, %v964
      %v966 = vpop.f32.mrf.mxu0
      %v967 = vadd.f32 0.0, %v966
      %968 = vmatmul.bf16.gmra.mxu0 %v930
      %v969 = vpop.f32.mrf.mxu0
      %v970 = vadd.f32 0.0, %v969
      %v971 = vpop.f32.mrf.mxu0
      %v972 = vadd.f32 0.0, %v971
      %973 = vmatmul.bf16.gmra.mxu0 %v933
      %v974 = vpop.f32.mrf.mxu0
      %v975 = vadd.f32 0.0, %v974
      %v976 = vpop.f32.mrf.mxu0
      %v977 = vadd.f32 0.0, %v976
      %978 = vmatmul.bf16.gmra.mxu0 %v936
      %v979 = vpop.f32.mrf.mxu0
      %v980 = vadd.f32 0.0, %v979
      %v981 = vpop.f32.mrf.mxu0
      %v982 = vadd.f32 0.0, %v981
      %983 = vmatmul.bf16.gmra.mxu0 %v939
      %v984 = vpop.f32.mrf.mxu0
      %v985 = vadd.f32 0.0, %v984
      %v986 = vpop.f32.mrf.mxu0
      %v987 = vadd.f32 0.0, %v986
      %988 = vmatmul.bf16.gmra.mxu0 %v942
      %v989 = vpop.f32.mrf.mxu0
      %v990 = vadd.f32 0.0, %v989
      %v991 = vpop.f32.mrf.mxu0
      %v992 = vadd.f32 0.0, %v991
      %993 = vmatmul.bf16.gmra.mxu0 %v945
      %v994 = vpop.f32.mrf.mxu0
      %v995 = vadd.f32 0.0, %v994
      %v996 = vpop.f32.mrf.mxu0
      %v997 = vadd.f32 0.0, %v996
      %998 = vdwg.mxu0
      %v999 = vadd.f32 %v866, %v960
      %v1000 = vadd.f32 %v867, %v962
      %v1001 = vadd.f32 %v868, %v965
      %v1002 = vadd.f32 %v869, %v967
      %v1003 = vadd.f32 %v870, %v970
      %v1004 = vadd.f32 %v871, %v972
      %v1005 = vadd.f32 %v872, %v975
      %v1006 = vadd.f32 %v873, %v977
      %v1007 = vadd.f32 %v874, %v980
      %v1008 = vadd.f32 %v875, %v982
      %v1009 = vadd.f32 %v876, %v985
      %v1010 = vadd.f32 %v877, %v987
      %v1011 = vadd.f32 %v878, %v990
      %v1012 = vadd.f32 %v879, %v992
      %v1013 = vadd.f32 %v880, %v995
      %v1014 = vadd.f32 %v881, %v997
      %s1015 = scalar_lea.vmem %s3, 2
      %v1016 = vld [vmem:[%s1015] sm:$0x3]
      %v1018 = vsel %vm661, %v1016, 0
      %1020 = vmatpush.bf16.msra.mxu0 0
      %1021 = vmatpush.bf16.msra.mxu0 0
      %1022 = vmatpush.bf16.msra.mxu0 0
      %1023 = vmatpush.bf16.msra.mxu0 0
      %1024 = vmatpush.bf16.msra.mxu0 0
      %1025 = vmatpush.bf16.msra.mxu0 0
      %1026 = vmatpush.bf16.msra.mxu0 0
      %1027 = vmatpush.bf16.msra.mxu0 %v1018
      %1028 = vmatmul.bf16.gmra.mxu0 %v641
      %v1029 = vpop.f32.mrf.mxu0
      %v1030 = vadd.f32 0.0, %v1029
      %v1031 = vpop.f32.mrf.mxu0
      %v1032 = vadd.f32 0.0, %v1031
      %1033 = vmatmul.bf16.gmra.mxu0 %v644
      %v1034 = vpop.f32.mrf.mxu0
      %v1035 = vadd.f32 0.0, %v1034
      %v1036 = vpop.f32.mrf.mxu0
      %v1037 = vadd.f32 0.0, %v1036
      %1038 = vmatmul.bf16.gmra.mxu0 %v647
      %v1039 = vpop.f32.mrf.mxu0
      %v1040 = vadd.f32 0.0, %v1039
      %v1041 = vpop.f32.mrf.mxu0
      %v1042 = vadd.f32 0.0, %v1041
      %1043 = vmatmul.bf16.gmra.mxu0 %v650
      %v1044 = vpop.f32.mrf.mxu0
      %v1045 = vadd.f32 0.0, %v1044
      %v1046 = vpop.f32.mrf.mxu0
      %v1047 = vadd.f32 0.0, %v1046
      %1048 = vmatmul.bf16.gmra.mxu0 %v653
      %v1049 = vpop.f32.mrf.mxu0
      %v1050 = vadd.f32 0.0, %v1049
      %v1051 = vpop.f32.mrf.mxu0
      %v1052 = vadd.f32 0.0, %v1051
      %1053 = vmatmul.bf16.gmra.mxu0 %v656
      %v1054 = vpop.f32.mrf.mxu0
      %v1055 = vadd.f32 0.0, %v1054
      %v1056 = vpop.f32.mrf.mxu0
      %v1057 = vadd.f32 0.0, %v1056
      %1058 = vmatmul.bf16.gmra.mxu0 %v659
      %v1059 = vpop.f32.mrf.mxu0
      %v1060 = vadd.f32 0.0, %v1059
      %v1061 = vpop.f32.mrf.mxu0
      %v1062 = vadd.f32 0.0, %v1061
      %1063 = vmatmul.bf16.gmra.mxu0 %v736
      %v1064 = vpop.f32.mrf.mxu0
      %v1065 = vadd.f32 0.0, %v1064
      %v1066 = vpop.f32.mrf.mxu0
      %v1067 = vadd.f32 0.0, %v1066
      %1068 = vdwg.mxu0
      %v1069 = vadd.f32 %v999, %v1030
      %v1070 = vadd.f32 %v1000, %v1032
      %v1071 = vadd.f32 %v1001, %v1035
      %v1072 = vadd.f32 %v1002, %v1037
      %v1073 = vadd.f32 %v1003, %v1040
      %v1074 = vadd.f32 %v1004, %v1042
      %v1075 = vadd.f32 %v1005, %v1045
      %v1076 = vadd.f32 %v1006, %v1047
      %v1077 = vadd.f32 %v1007, %v1050
      %v1078 = vadd.f32 %v1008, %v1052
      %v1079 = vadd.f32 %v1009, %v1055
      %v1080 = vadd.f32 %v1010, %v1057
      %v1081 = vadd.f32 %v1011, %v1060
      %v1082 = vadd.f32 %v1012, %v1062
      %v1083 = vadd.f32 %v1013, %v1065
      %v1084 = vadd.f32 %v1014, %v1067
      %vm1093 = vcmask 1042432
      %vm1094 = vcmask 1046532
      %vm1095 = vmor %vm1093, %vm1094
      %v1096 = vrot.slane %v337, 5
      %v1097 = vrot.slane %v1096, 4
      %v1098 = vrot.slane %v338, 5
      %v1099 = vsel %vm1095, %v1097, %v1098
      %v1100 = vrot.slane %v1098, 4
      %v1101 = vrot.slane %v339, 5
      %v1102 = vsel %vm1095, %v1100, %v1101
      %v1103 = vrot.slane %v340, 5
      %v1104 = vrot.slane %v1103, 4
      %v1105 = vrot.slane %v341, 5
      %v1106 = vsel %vm1095, %v1104, %v1105
      %v1107 = vrot.slane %v1105, 4
      %v1108 = vrot.slane %v342, 5
      %v1109 = vsel %vm1095, %v1107, %v1108
      %v1110 = vrot.slane %v343, 5
      %v1111 = vrot.slane %v1110, 4
      %v1112 = vrot.slane %v344, 5
      %v1113 = vsel %vm1095, %v1111, %v1112
      %v1114 = vrot.slane %v1112, 4
      %v1115 = vrot.slane %v345, 5
      %v1116 = vsel %vm1095, %v1114, %v1115
      %v1117 = vrot.slane %v346, 5
      %v1118 = vrot.slane %v1117, 4
      %v1119 = vrot.slane %v347, 5
      %v1120 = vsel %vm1095, %v1118, %v1119
      %v1121 = vrot.slane %v1119, 4
      %v1122 = vrot.slane %v348, 5
      %v1123 = vsel %vm1095, %v1121, %v1122
      %v1124 = vrot.slane %v349, 5
      %v1125 = vrot.slane %v1124, 4
      %v1126 = vrot.slane %v350, 5
      %v1127 = vsel %vm1095, %v1125, %v1126
      %v1128 = vrot.slane %v1126, 4
      %v1129 = vrot.slane %v351, 5
      %v1130 = vsel %vm1095, %v1128, %v1129
      %v1131 = vrot.slane %v352, 5
      %v1132 = vrot.slane %v1131, 4
      %v1133 = vrot.slane %v353, 5
      %v1134 = vsel %vm1095, %v1132, %v1133
      %v1135 = vrot.slane %v1133, 4
      %v1136 = vrot.slane %v354, 5
      %v1137 = vsel %vm1095, %v1135, %v1136
      %v1138 = vrot.slane %v355, 5
      %v1139 = vrot.slane %v1138, 4
      %v1140 = vrot.slane %v356, 5
      %v1141 = vsel %vm1095, %v1139, %v1140
      %v1142 = vrot.slane %v1140, 4
      %v1143 = vrot.slane %v357, 5
      %v1144 = vsel %vm1095, %v1142, %v1143
      %v1145 = vrot.slane %v358, 5
      %v1146 = vrot.slane %v1145, 4
      %v1147 = vrot.slane %v359, 5
      %v1148 = vsel %vm1095, %v1146, %v1147
      %v1149 = vrot.slane %v1147, 4
      %v1150 = vrot.slane %v360, 5
      %v1151 = vsel %vm1095, %v1149, %v1150
      %s1152 = scalar_lea.vmem %s3, 4
      %v1153 = vld [vmem:[%s1152] sm:$0x3]
      %v1154 = vunpack.c.l.b16 %v1099
      %v1155 = vunpack.c.l.b16 %v1102
      %v1156 = vunpack.c.l.b16 %v1106
      %v1157 = vunpack.c.l.b16 %v1109
      %v1158 = vunpack.c.l.b16 %v1113
      %v1159 = vunpack.c.l.b16 %v1116
      %v1160 = vunpack.c.l.b16 %v1120
      %v1161 = vunpack.c.l.b16 %v1123
      %v1162 = vunpack.c.l.b16 %v1127
      %v1163 = vunpack.c.l.b16 %v1130
      %v1164 = vunpack.c.l.b16 %v1134
      %v1165 = vunpack.c.l.b16 %v1137
      %v1166 = vunpack.c.l.b16 %v1141
      %v1167 = vunpack.c.l.b16 %v1144
      %v1168 = vunpack.c.l.b16 %v1148
      %v1169 = vunpack.c.l.b16 %v1151
      %v1170 = vpack.c.b16 %v1155, %v1154
      %v1171 = vpack.c.b16 %v1157, %v1156
      %v1172 = vpack.c.b16 %v1159, %v1158
      %v1173 = vpack.c.b16 %v1161, %v1160
      %v1174 = vpack.c.b16 %v1163, %v1162
      %v1175 = vpack.c.b16 %v1165, %v1164
      %v1176 = vpack.c.b16 %v1167, %v1166
      %v1177 = vpack.c.b16 %v1169, %v1168
      %v1179 = vsel %vm636, %v1170, 0
      %v1182 = vsel %vm636, %v1171, 0
      %v1185 = vsel %vm636, %v1172, 0
      %v1188 = vsel %vm636, %v1173, 0
      %v1191 = vsel %vm636, %v1174, 0
      %v1194 = vsel %vm636, %v1175, 0
      %v1197 = vsel %vm636, %v1176, 0
      %v1200 = vsel %vm636, %v1177, 0
      %v1203 = vsel %vm661, %v1153, 0
      %1205 = vmatpush.bf16.msra.mxu0 0
      %1206 = vmatpush.bf16.msra.mxu0 0
      %1207 = vmatpush.bf16.msra.mxu0 0
      %1208 = vmatpush.bf16.msra.mxu0 0
      %1209 = vmatpush.bf16.msra.mxu0 0
      %1210 = vmatpush.bf16.msra.mxu0 0
      %1211 = vmatpush.bf16.msra.mxu0 0
      %1212 = vmatpush.bf16.msra.mxu0 %v1203
      %1213 = vmatmul.bf16.gmra.mxu0 %v1179
      %v1214 = vpop.f32.mrf.mxu0
      %v1215 = vadd.f32 0.0, %v1214
      %v1216 = vpop.f32.mrf.mxu0
      %v1217 = vadd.f32 0.0, %v1216
      %1218 = vmatmul.bf16.gmra.mxu0 %v1182
      %v1219 = vpop.f32.mrf.mxu0
      %v1220 = vadd.f32 0.0, %v1219
      %v1221 = vpop.f32.mrf.mxu0
      %v1222 = vadd.f32 0.0, %v1221
      %1223 = vmatmul.bf16.gmra.mxu0 %v1185
      %v1224 = vpop.f32.mrf.mxu0
      %v1225 = vadd.f32 0.0, %v1224
      %v1226 = vpop.f32.mrf.mxu0
      %v1227 = vadd.f32 0.0, %v1226
      %1228 = vmatmul.bf16.gmra.mxu0 %v1188
      %v1229 = vpop.f32.mrf.mxu0
      %v1230 = vadd.f32 0.0, %v1229
      %v1231 = vpop.f32.mrf.mxu0
      %v1232 = vadd.f32 0.0, %v1231
      %1233 = vmatmul.bf16.gmra.mxu0 %v1191
      %v1234 = vpop.f32.mrf.mxu0
      %v1235 = vadd.f32 0.0, %v1234
      %v1236 = vpop.f32.mrf.mxu0
      %v1237 = vadd.f32 0.0, %v1236
      %1238 = vmatmul.bf16.gmra.mxu0 %v1194
      %v1239 = vpop.f32.mrf.mxu0
      %v1240 = vadd.f32 0.0, %v1239
      %v1241 = vpop.f32.mrf.mxu0
      %v1242 = vadd.f32 0.0, %v1241
      %1243 = vmatmul.bf16.gmra.mxu0 %v1197
      %v1244 = vpop.f32.mrf.mxu0
      %v1245 = vadd.f32 0.0, %v1244
      %v1246 = vpop.f32.mrf.mxu0
      %v1247 = vadd.f32 0.0, %v1246
      %1248 = vmatmul.bf16.gmra.mxu0 %v1200
      %v1249 = vpop.f32.mrf.mxu0
      %v1250 = vadd.f32 0.0, %v1249
      %v1251 = vpop.f32.mrf.mxu0
      %v1252 = vadd.f32 0.0, %v1251
      %1253 = vdwg.mxu0
      %v1254 = vadd.f32 %v1069, %v1215
      %v1255 = vadd.f32 %v1070, %v1217
      %v1256 = vadd.f32 %v1071, %v1220
      %v1257 = vadd.f32 %v1072, %v1222
      %v1258 = vadd.f32 %v1073, %v1225
      %v1259 = vadd.f32 %v1074, %v1227
      %v1260 = vadd.f32 %v1075, %v1230
      %v1261 = vadd.f32 %v1076, %v1232
      %v1262 = vadd.f32 %v1077, %v1235
      %v1263 = vadd.f32 %v1078, %v1237
      %v1264 = vadd.f32 %v1079, %v1240
      %v1265 = vadd.f32 %v1080, %v1242
      %v1266 = vadd.f32 %v1081, %v1245
      %v1267 = vadd.f32 %v1082, %v1247
      %v1268 = vadd.f32 %v1083, %v1250
      %v1269 = vadd.f32 %v1084, %v1252
      %vm1270 = vcmask 64512
      %1271 = vst.msk [vmem:[%s331] sm:$0xff] %vm1270, %v1254
      %1272 = vst.msk [vmem:[%s331 + $0x8] sm:$0xff] %vm1270, %v1255
      %1273 = vst.msk [vmem:[%s331 + $0x10] sm:$0xff] %vm1270, %v1256
      %1274 = vst.msk [vmem:[%s331 + $0x18] sm:$0xff] %vm1270, %v1257
      %1275 = vst.msk [vmem:[%s331 + $0x20] sm:$0xff] %vm1270, %v1258
      %1276 = vst.msk [vmem:[%s331 + $0x28] sm:$0xff] %vm1270, %v1259
      %1277 = vst.msk [vmem:[%s331 + $0x30] sm:$0xff] %vm1270, %v1260
      %1278 = vst.msk [vmem:[%s331 + $0x38] sm:$0xff] %vm1270, %v1261
      %1279 = vst.msk [vmem:[%s331 + $0x40] sm:$0xff] %vm1270, %v1262
      %1280 = vst.msk [vmem:[%s331 + $0x48] sm:$0xff] %vm1270, %v1263
      %1281 = vst.msk [vmem:[%s331 + $0x50] sm:$0xff] %vm1270, %v1264
      %1282 = vst.msk [vmem:[%s331 + $0x58] sm:$0xff] %vm1270, %v1265
      %1283 = vst.msk [vmem:[%s331 + $0x60] sm:$0xff] %vm1270, %v1266
      %1284 = vst.msk [vmem:[%s331 + $0x68] sm:$0xff] %vm1270, %v1267
      %1285 = vst.msk [vmem:[%s331 + $0x70] sm:$0xff] %vm1270, %v1268
      %1286 = vst.msk [vmem:[%s331 + $0x78] sm:$0xff] %vm1270, %v1269
      %s1287 = smul.u32 8, %s21
      %p1288 = scmp.lt.s32.totalorder %s20, 1
      %s1289 = scalar_select %p1288, %s20, 1
      %p1290 = scmp.lt.s32.totalorder %s1287, 15
      %s1291 = scalar_select %p1290, %s1287, 15
      %s1292 = smul.addr %s1291, 2
      %s1293 = smul.addr %s1289, 32
      %s1294 = sadd.s32 %s1292, %s1293
      %s1295 = smul.addr %s1294, 8
      %s1296 = scalar_lea.vmem %s5, %s1295
      // Predicated region
      $region41: #{tpu_custom_call.1} parent=39 // pred_check
        %p1297 = pneg %p167
      $region42: #{tpu_custom_call.1} parent=39 // pred_check_branch
        %1299 = sbr.rel (%p1297) target = $region44
      $region43: #{tpu_custom_call.1} parent=39 // pred_region
        %s1300 = smul.u32 8, %s21
      $region44: #{tpu_custom_call.1} parent=39 // pred_fallthru
        _
    $region40: #{tpu_custom_call.1} parent=5 // pred_fallthru
      _
    %p1301 = scmp.le.s32.totalorder 2, %s11
    // Predicated region
    $region45: #{tpu_custom_call.1} parent=5 // pred_check
      %p1302 = pneg %p1301
    $region46: #{tpu_custom_call.1} parent=5 // pred_check_branch
      %1304 = sbr.rel (%p1302) target = $region48
    $region47: #{tpu_custom_call.1} parent=5 // pred_region
      %s1305 = ssub.s32 %s11, 2
      // Predicated region
      $region49: #{tpu_custom_call.1} parent=47 // pred_check
        %p1306 = pneg %p173
      $region50: #{tpu_custom_call.1} parent=47 // pred_check_branch
        %1308 = sbr.rel (%p1306) target = $region52
      $region51: #{tpu_custom_call.1} parent=47 // pred_region
        %s1309 = smul.u32 8, %s23
        %p1310 = scmp.lt.s32.totalorder %s22, 1
        %s1311 = scalar_select %p1310, %s22, 1
        %p1312 = scmp.lt.s32.totalorder %s1309, 15
        %s1313 = scalar_select %p1312, %s1309, 15
        %s1314 = smul.addr %s1313, 2
        %s1315 = smul.addr %s1311, 32
        %s1316 = sadd.s32 %s1314, %s1315
        %s1317 = smul.addr %s1316, 8
        %s1318 = scalar_lea.vmem %s5, %s1317
      $region52: #{tpu_custom_call.1} parent=47 // pred_fallthru
        _
    $region48: #{tpu_custom_call.1} parent=5 // pred_fallthru
      _
  $region6: #{tpu_custom_call.1} parent=0 // loop_footer
    %s15 = sadd.s32 1, %s11
  $region7: #{tpu_custom_call.1} parent=0 // loop_footer_branch
    %10 = sbr.rel target = $region3
  $region8: #{tpu_custom_call.1} parent=0 // loop_exit
    _

</llo_original>
